<compile_context>
chip_gen: v7x
topology: tpu7x:2x2x1
jax: 0.10.0
libtpu: 0.0.40
codegen_flags: <defaults>
</compile_context>

<pallas_src>
import functools

import jax
import jax.numpy as jnp
from jax import lax
from jax.experimental import pallas as pl
from jax.experimental.pallas import tpu as pltpu

LANE = 128                       # lane width (last dim of every block)
MAX_TM = 8192                    # max sublane rows per block (4 MiB f32/block)
VMEM_LIMIT = 32 * 1024 * 1024    # explicit scoped-VMEM cap (safe on v5e/v6e/v7x)


def _round_up(a, b):
    return (a + b - 1) // b * b


def _sublane_multiple(*dtypes):
    """Native sublane packing: 8 for 32-bit, 16 for 16-bit, 32 for 8-bit."""
    m = 8
    for dt in dtypes:
        size = jnp.dtype(dt).itemsize
        m = max(m, 8 * max(1, 4 // max(size, 1)))
    return m


def _focal_elem(x, t, alpha, gamma):
    """Per-element focal loss, matching the PyTorch forward exactly.

    BCE           = t*softplus(-x) + (1-t)*softplus(x) = softplus(x) - t*x
    pt            = exp(-BCE)
    BCE_posweight = alpha*t*softplus(-x) + (1-t)*softplus(x)
                  = BCE + (alpha-1)*t*softplus(-x)
    FL            = (1-pt)^gamma * BCE_posweight
    """
    sp_pos = jnp.maximum(x, 0.0) + jnp.log1p(jnp.exp(-jnp.abs(x)))  # softplus(x)
    bce = sp_pos - t * x
    pt = jnp.exp(-bce)
    one_m_pt = 1.0 - pt
    if gamma == 2.0:            # module default: avoid power -> exp(g*log(.))
        mod = one_m_pt * one_m_pt
    elif gamma == 1.0:
        mod = one_m_pt
    else:
        mod = jnp.power(one_m_pt, gamma)
    if alpha == 1.0:            # module default
        bce_w = bce
    else:
        bce_w = bce + (alpha - 1.0) * t * (sp_pos - x)   # softplus(-x) = sp_pos - x
    return mod * bce_w


def _focal_none_kernel(x_ref, t_ref, o_ref, *, alpha, gamma):
    x = x_ref[...].astype(jnp.float32)
    t = t_ref[...].astype(jnp.float32)
    o_ref[...] = _focal_elem(x, t, alpha, gamma).astype(o_ref.dtype)


def _focal_sum_kernel(x_ref, t_ref, acc_ref, *, alpha, gamma, n_valid, steps,
                      last_blk):
    c = pl.program_id(0)
    i = pl.program_id(1)

    @pl.when(i == 0)
    def _():
        acc_ref[...] = jnp.zeros_like(acc_ref)

    x = x_ref[...].astype(jnp.float32)
    t = t_ref[...].astype(jnp.float32)
    fl = _focal_elem(x, t, alpha, gamma)
    tm = fl.shape[0]

    blk = c * steps + i          # logical block index (may exceed last_blk on
                                 # the clamped dummy step of an odd split)

    def _partial_sum(v):
        # Pure-VPU, sublane-aligned reduce: (tm,128) -> (8,128).
        return v.reshape(tm // 8, 8, LANE).sum(axis=0)

    @pl.when(blk < last_blk)
    def _():                     # interior blocks: always fully valid
        acc_ref[...] += _partial_sum(fl)

    @pl.when(blk >= last_blk)
    def _():                     # tail / dummy blocks: mask invalid elements
        start = blk * (tm * LANE)
        row = lax.broadcasted_iota(jnp.int32, (tm, LANE), 0)
        lane = lax.broadcasted_iota(jnp.int32, (tm, LANE), 1)
        valid = (start + row * LANE + lane) < n_valid
        acc_ref[...] += _partial_sum(jnp.where(valid, fl, 0.0))


def focal_loss(logits, targets, alpha=1.0, gamma=2.0, reduce='mean'):
    """JAX/Pallas equivalent of FocalLoss.forward(input, target).

    Callers should NOT pre-cast narrow inputs to f32: bf16 logits / narrow
    targets are streamed at native width and cast to f32 inside the kernel.
    """
    orig_shape = logits.shape
    orig_dtype = logits.dtype
    n = logits.size
    alpha = float(alpha)
    gamma = float(gamma)

    sub = _sublane_multiple(logits.dtype, targets.dtype)
    rows = pl.cdiv(n, LANE)
    if rows >= MAX_TM:
        tm = MAX_TM
        rows_slab = rows          # big arrays: never pad to the block footprint
    else:
        rows_slab = _round_up(rows, sub)   # small arrays: tiny pad, one block
        tm = rows_slab
    nb = pl.cdiv(rows_slab, tm)

    def _slab(a):
        flat = a.reshape(-1)
        pad = rows_slab * LANE - n
        if pad:                   # only for ragged n or sub-block-sized arrays
            flat = jnp.pad(flat, (0, pad))
        return flat.reshape(rows_slab, LANE)

    x2d = _slab(logits)
    t2d = _slab(targets)

    if reduce == 'none':
        out = pl.pallas_call(
            functools.partial(_focal_none_kernel, alpha=alpha, gamma=gamma),
            out_shape=jax.ShapeDtypeStruct((rows_slab, LANE), orig_dtype),
            grid_spec=pltpu.PrefetchScalarGridSpec(
                num_scalar_prefetch=0, grid=(nb,),
                in_specs=[pl.BlockSpec((tm, LANE), lambda i: (i, 0)),
                          pl.BlockSpec((tm, LANE), lambda i: (i, 0))],
                out_specs=pl.BlockSpec((tm, LANE), lambda i: (i, 0))),
            compiler_params=pltpu.CompilerParams(
                dimension_semantics=("parallel",),
                vmem_limit_bytes=VMEM_LIMIT),
        )(x2d, t2d)
        flat = out.reshape(-1)
        if rows_slab * LANE != n:           # slice only when actually padded
            flat = flat[:n]
        return flat.reshape(orig_shape)

    # 'sum' / 'mean': split the real blocks into two contiguous halves over a
    # leading "parallel" axis (v7x megacore); harmless on single-TC chips.
    nsplit = 2 if nb >= 2 else 1
    steps = pl.cdiv(nb, nsplit)
    last_blk = nb - 1

    if nsplit * steps == nb:                # even split: plain index map
        in_map = lambda c, i: (c * steps + i, 0)
    else:                                   # odd split: clamp the dummy step
        in_map = lambda c, i: (jnp.minimum(c * steps + i, last_blk), 0)

    partials = pl.pallas_call(
        functools.partial(_focal_sum_kernel, alpha=alpha, gamma=gamma,
                          n_valid=n, steps=steps, last_blk=last_blk),
        out_shape=jax.ShapeDtypeStruct((nsplit * 8, LANE), jnp.float32),
        grid_spec=pltpu.PrefetchScalarGridSpec(
            num_scalar_prefetch=0, grid=(nsplit, steps),
            in_specs=[pl.BlockSpec((tm, LANE), in_map),
                      pl.BlockSpec((tm, LANE), in_map)],
            out_specs=pl.BlockSpec((8, LANE), lambda c, i: (c, 0))),
        compiler_params=pltpu.CompilerParams(
            dimension_semantics=("parallel", "arbitrary"),
            vmem_limit_bytes=VMEM_LIMIT),
    )(x2d, t2d)

    total = jnp.sum(partials)
    if reduce == 'sum':
        return total
    return total / jnp.float32(n)           # 'mean' (default)


def _ref_focal(x, t, alpha=1.0, gamma=2.0, reduce='mean'):
    x = x.astype(jnp.float32)
    t = t.astype(jnp.float32)
    sp_pos = jax.nn.softplus(x)
    sp_neg = jax.nn.softplus(-x)
    bce = t * sp_neg + (1.0 - t) * sp_pos
    pt = jnp.exp(-bce)
    bce_w = alpha * t * sp_neg + (1.0 - t) * sp_pos
    fl = jnp.power(1.0 - pt, gamma) * bce_w
    if reduce == 'none':
        return fl
    if reduce == 'sum':
        return jnp.sum(fl)
    return jnp.mean(fl)


if __name__ == "__main__":
    key = jax.random.PRNGKey(0)
    k1, k2 = jax.random.split(key)

    # FocalLoss(alpha=1, gamma=2, reduce='mean'); logits + binary targets.
    x = jax.random.normal(k1, (2, 4, 16, 16), dtype=jnp.float32) * 2.0
    t = jax.random.bernoulli(k2, 0.5, (2, 4, 16, 16)).astype(jnp.float32)

    out_mean = jax.block_until_ready(focal_loss(x, t, 1.0, 2.0, 'mean'))
    ref_mean = _ref_focal(x, t, 1.0, 2.0, 'mean')
    assert jnp.allclose(out_mean, ref_mean, rtol=1e-5, atol=1e-6), (out_mean, ref_mean)

    out_sum = jax.block_until_ready(focal_loss(x, t, 1.0, 2.0, 'sum'))
    ref_sum = _ref_focal(x, t, 1.0, 2.0, 'sum')
    assert jnp.allclose(out_sum, ref_sum, rtol=1e-5, atol=1e-4), (out_sum, ref_sum)

    out_none = jax.block_until_ready(focal_loss(x, t, 1.0, 2.0, 'none'))
    ref_none = _ref_focal(x, t, 1.0, 2.0, 'none')
    assert ref_none.shape == out_none.shape
    assert jnp.allclose(out_none, ref_none, rtol=1e-5, atol=1e-6)

    # Non-default alpha/gamma.
    out_ag = jax.block_until_ready(focal_loss(x, t, 0.75, 3.0, 'mean'))
    ref_ag = _ref_focal(x, t, 0.75, 3.0, 'mean')
    assert jnp.allclose(out_ag, ref_ag, rtol=1e-5, atol=1e-6), (out_ag, ref_ag)

    # Ragged shape exercising the lane-pad + tail-mask path (105 elements).
    k3, k4 = jax.random.split(k2)
    xr = jax.random.normal(k3, (3, 5, 7), dtype=jnp.float32)
    tr = jax.random.bernoulli(k4, 0.5, (3, 5, 7)).astype(jnp.float32)
    out_r = jax.block_until_ready(focal_loss(xr, tr, 1.0, 2.0, 'mean'))
    ref_r = _ref_focal(xr, tr, 1.0, 2.0, 'mean')
    assert jnp.allclose(out_r, ref_r, rtol=1e-5, atol=1e-6), (out_r, ref_r)

    # Narrow-dtype path: bf16 logits/targets streamed at native width.
    xb = x.astype(jnp.bfloat16)
    tb = t.astype(jnp.bfloat16)
    out_b = jax.block_until_ready(focal_loss(xb, tb, 1.0, 2.0, 'mean'))
    ref_b = _ref_focal(xb, tb, 1.0, 2.0, 'mean')
    assert jnp.allclose(out_b, ref_b, rtol=1e-5, atol=1e-5), (out_b, ref_b)

    print("KERNEL_OK")
</pallas_src>

<mosaic_0001>
module attributes {stable_mosaic.version = 11 : i64} {
  func.func @_focal_sum_kernel(%arg0: i32, %arg1: i32, %arg2: memref<16x128xf32, #tpu.memory_space<vmem>>, %arg3: memref<16x128xf32, #tpu.memory_space<vmem>>, %arg4: memref<8x128xf32, #tpu.memory_space<vmem>>) attributes {dimension_semantics = [#tpu.dimension_semantics<parallel>, #tpu.dimension_semantics<arbitrary>], iteration_bounds = array<i64: 1, 1>, scalar_prefetch = 0 : i64, scratch_operands = 0 : i64, tpu.core_type = #tpu.core_type<tc>, window_params = [{transform_indices = @transform_0, window_bounds = array<i64: 16, 128>}, {transform_indices = @transform_1, window_bounds = array<i64: 16, 128>}, {transform_indices = @transform_2, window_bounds = array<i64: 8, 128>}]} {
    %c0_i32 = arith.constant 0 : i32
    %0 = arith.cmpi eq, %arg1, %c0_i32 : i32
    %1 = arith.extui %0 : i1 to i32
    %c0_i32_0 = arith.constant 0 : i32
    %2 = arith.cmpi ne, %1, %c0_i32_0 : i32
    scf.if %2 {
      %cst_11 = arith.constant 0.000000e+00 : f32
      %30 = vector.broadcast %cst_11 : f32 to vector<8x128xf32>
      %c0_12 = arith.constant 0 : index
      %c0_13 = arith.constant 0 : index
      %31 = vector.load %arg4[%c0_12, %c0_13] : memref<8x128xf32, #tpu.memory_space<vmem>>, vector<8x128xf32>
      tpu.vector_store %arg4[%c0_12, %c0_13], %30 {strides = array<i32>} : memref<8x128xf32, #tpu.memory_space<vmem>>, vector<8x128xf32>,
    } else {
    }
    %c0 = arith.constant 0 : index
    %c0_1 = arith.constant 0 : index
    %3 = vector.load %arg2[%c0, %c0_1] : memref<16x128xf32, #tpu.memory_space<vmem>>, vector<16x128xf32>
    %c0_2 = arith.constant 0 : index
    %c0_3 = arith.constant 0 : index
    %4 = vector.load %arg3[%c0_2, %c0_3] : memref<16x128xf32, #tpu.memory_space<vmem>>, vector<16x128xf32>
    %cst = arith.constant 0.000000e+00 : f32
    %5 = vector.broadcast %cst : f32 to vector<16x128xf32>
    %6 = arith.maximumf %3, %5 : vector<16x128xf32>
    %7 = math.absf %3 : vector<16x128xf32>
    %cst_4 = arith.constant 0.000000e+00 : f32
    %8 = vector.broadcast %cst_4 : f32 to vector<16x128xf32>
    %9 = arith.subf %8, %7 : vector<16x128xf32>
    %10 = math.exp %9 : vector<16x128xf32>
    %11 = math.log1p %10 : vector<16x128xf32>
    %12 = arith.addf %6, %11 : vector<16x128xf32>
    %13 = arith.mulf %4, %3 : vector<16x128xf32>
    %14 = arith.subf %12, %13 : vector<16x128xf32>
    %cst_5 = arith.constant 0.000000e+00 : f32
    %15 = vector.broadcast %cst_5 : f32 to vector<16x128xf32>
    %16 = arith.subf %15, %14 : vector<16x128xf32>
    %17 = math.exp %16 : vector<16x128xf32>
    %cst_6 = arith.constant 1.000000e+00 : f32
    %18 = vector.broadcast %cst_6 : f32 to vector<16x128xf32>
    %19 = arith.subf %18, %17 : vector<16x128xf32>
    %20 = arith.mulf %19, %19 : vector<16x128xf32>
    %21 = arith.mulf %20, %14 : vector<16x128xf32>
    %c1_i32 = arith.constant 1 : i32
    %22 = arith.muli %arg0, %c1_i32 : i32
    %23 = arith.addi %22, %arg1 : i32
    %c0_i32_7 = arith.constant 0 : i32
    %24 = arith.cmpi slt, %23, %c0_i32_7 : i32
    %25 = arith.extui %24 : i1 to i32
    %c0_i32_8 = arith.constant 0 : i32
    %26 = arith.cmpi ne, %25, %c0_i32_8 : i32
    scf.if %26 {
      %c0_11 = arith.constant 0 : index
      %c0_12 = arith.constant 0 : index
      %30 = vector.load %arg4[%c0_11, %c0_12] : memref<8x128xf32, #tpu.memory_space<vmem>>, vector<8x128xf32>
      %31 = vector.shape_cast %21 : vector<16x128xf32> to vector<2x8x128xf32>
      %cst_13 = arith.constant dense<0.000000e+00> : vector<8x128xf32>
      %32 = vector.multi_reduction <add>, %31, %cst_13 [0] : vector<2x8x128xf32> to vector<8x128xf32>
      %33 = arith.addf %30, %32 : vector<8x128xf32>
      %c0_14 = arith.constant 0 : index
      %c0_15 = arith.constant 0 : index
      %34 = vector.load %arg4[%c0_14, %c0_15] : memref<8x128xf32, #tpu.memory_space<vmem>>, vector<8x128xf32>
      tpu.vector_store %arg4[%c0_14, %c0_15], %33 {strides = array<i32>} : memref<8x128xf32, #tpu.memory_space<vmem>>, vector<8x128xf32>,
    } else {
    }
    %c0_i32_9 = arith.constant 0 : i32
    %27 = arith.cmpi sge, %23, %c0_i32_9 : i32
    %28 = arith.extui %27 : i1 to i32
    %c0_i32_10 = arith.constant 0 : i32
    %29 = arith.cmpi ne, %28, %c0_i32_10 : i32
    scf.if %29 {
      %c2048_i32 = arith.constant 2048 : i32
      %30 = arith.muli %23, %c2048_i32 : i32
      %31 = tpu.iota {dimensions = array<i32: 0>} : vector<16x128xi32>
      %32 = tpu.iota {dimensions = array<i32: 1>} : vector<16x128xi32>
      %c128_i32 = arith.constant 128 : i32
      %33 = vector.broadcast %c128_i32 : i32 to vector<16x128xi32>
      %34 = arith.muli %31, %33 : vector<16x128xi32>
      %35 = vector.broadcast %30 : i32 to vector<16x128xi32>
      %36 = arith.addi %35, %34 : vector<16x128xi32>
      %37 = arith.addi %36, %32 : vector<16x128xi32>
      %c2048_i32_11 = arith.constant 2048 : i32
      %38 = vector.broadcast %c2048_i32_11 : i32 to vector<16x128xi32>
      %39 = arith.cmpi slt, %37, %38 : vector<16x128xi32>
      %c0_12 = arith.constant 0 : index
      %c0_13 = arith.constant 0 : index
      %40 = vector.load %arg4[%c0_12, %c0_13] : memref<8x128xf32, #tpu.memory_space<vmem>>, vector<8x128xf32>
      %cst_14 = arith.constant 0.000000e+00 : f32
      %41 = vector.broadcast %cst_14 : f32 to vector<16x128xf32>
      %42 = arith.select %39, %21, %41 : vector<16x128xi1>, vector<16x128xf32>
      %43 = vector.shape_cast %42 : vector<16x128xf32> to vector<2x8x128xf32>
      %cst_15 = arith.constant dense<0.000000e+00> : vector<8x128xf32>
      %44 = vector.multi_reduction <add>, %43, %cst_15 [0] : vector<2x8x128xf32> to vector<8x128xf32>
      %45 = arith.addf %40, %44 : vector<8x128xf32>
      %c0_16 = arith.constant 0 : index
      %c0_17 = arith.constant 0 : index
      %46 = vector.load %arg4[%c0_16, %c0_17] : memref<8x128xf32, #tpu.memory_space<vmem>>, vector<8x128xf32>
      tpu.vector_store %arg4[%c0_16, %c0_17], %45 {strides = array<i32>} : memref<8x128xf32, #tpu.memory_space<vmem>>, vector<8x128xf32>,
    } else {
    }
    return
  }
  func.func @transform_0(%arg0: i32, %arg1: i32) -> (i32, i32) {
    %c1_i32 = arith.constant 1 : i32
    %0 = arith.muli %arg0, %c1_i32 : i32
    %1 = arith.addi %0, %arg1 : i32
    %c0_i32 = arith.constant 0 : i32
    %c0_i32_0 = arith.constant 0 : i32
    return %1, %c0_i32 : i32, i32
  }
  func.func @transform_1(%arg0: i32, %arg1: i32) -> (i32, i32) {
    %c1_i32 = arith.constant 1 : i32
    %0 = arith.muli %arg0, %c1_i32 : i32
    %1 = arith.addi %0, %arg1 : i32
    %c0_i32 = arith.constant 0 : i32
    %c0_i32_0 = arith.constant 0 : i32
    return %1, %c0_i32 : i32, i32
  }
  func.func @transform_2(%arg0: i32, %arg1: i32) -> (i32, i32) {
    %c0_i32 = arith.constant 0 : i32
    %c0_i32_0 = arith.constant 0 : i32
    return %arg0, %c0_i32 : i32, i32
  }
}

</mosaic_0001>

<llo_original>
// kernel: tpu_custom_call.1
$region0: #{tpu_custom_call.1}
  #allocation0 [shape = 'u32[]', space=smem, size = 0x4, offset = 0x4, fixed_abs, tag = 'smem constant byte address 0x4 - core index']
  #allocation1 [shape = 'u32[144,128]{1,0:T(1,128)}', space=vmem, size = 0x12000, scoped, tag = 'internal scratch']
  %s0 = inlined_call_operand.hbm [shape: f32[16,128], index: 0, kind: input, shape index: {}]
  %s1 = inlined_call_operand.hbm [shape: f32[16,128], index: 1, kind: input, shape index: {}]
  %s2 = inlined_call_operand.hbm [shape: f32[8,128], index: 2, kind: output, shape index: {}]
  %s3 = sld [smem:[#allocation0]]
  $region38: #{tpu_custom_call.1} parent=0
    _
  %s5 = ssub.s32 1, %s3
  %s6 = scalar_select 0, %s5, %s3
  $region1: #{tpu_custom_call.1} parent=0
    #allocation2 [shape = 'u8[8192]{0}', space=vmem, size = 0x2000, scoped, tag = 'input window, operand 0, single buffered']
    #allocation3 [shape = 's32[1]{0}', space=sflag, size = 0x4, scoped, tag = 'scoped memory for tpu_custom_call.1']
    #allocation4 [shape = 's32[1]{0}', space=sflag, size = 0x4, scoped, tag = 'scoped memory for tpu_custom_call.1']
    #allocation5 [shape = 'u8[8192]{0}', space=vmem, size = 0x2000, scoped, tag = 'input window, operand 1, single buffered']
    #allocation6 [shape = 's32[1]{0}', space=sflag, size = 0x4, scoped, tag = 'scoped memory for tpu_custom_call.1']
    #allocation7 [shape = 'u8[4096]{0}', space=vmem, size = 0x1000, scoped, tag = 'output window, operand 0, single buffered']
    %7 = vsyncpa [#allocation3], 0
    %8 = vsyncpa [#allocation6], 0
    %9 = vsyncpa [#allocation4], 0
    // Predicated region
    $region2: #{tpu_custom_call.1} parent=1 // pred_check
      _
    $region3: #{tpu_custom_call.1} parent=1 // pred_check_branch
      %11 = sbr.rel (0) target = $region5
    $region4: #{tpu_custom_call.1} parent=1 // pred_region
      %s12 = sadd.s32 0, 0
      %s13 = smul.u32 2, %s12
      %s15 = ssub.s32 256, 256
      %16 = vsyncadd [#allocation3], %s15
      %s17 = smul.addr %s13, 128
      %s18 = scalar_lea.hbm %s0, %s17
      %s19 = sshll.u32 [#allocation2], 4
      %s20 = int_to_ptr.vmem [resolvable:$true] %s19
      %25 = dma.hbm_to_vmem [thread:$0]  %s18, 256, %s20, [#allocation3], 128, 128, 8
    $region5: #{tpu_custom_call.1} parent=1 // pred_fallthru
      _
    // Predicated region
    $region6: #{tpu_custom_call.1} parent=1 // pred_check
      _
    $region7: #{tpu_custom_call.1} parent=1 // pred_check_branch
      %27 = sbr.rel (0) target = $region9
    $region8: #{tpu_custom_call.1} parent=1 // pred_region
      %s28 = sadd.s32 0, 0
      %s29 = smul.u32 2, %s28
      %s31 = ssub.s32 256, 256
      %32 = vsyncadd [#allocation6], %s31
      %s33 = smul.addr %s29, 128
      %s34 = scalar_lea.hbm %s1, %s33
      %s35 = sshll.u32 [#allocation5], 4
      %s36 = int_to_ptr.vmem [resolvable:$true] %s35
      %41 = dma.hbm_to_vmem [thread:$0]  %s34, 256, %s36, [#allocation6], 128, 128, 8
    $region9: #{tpu_custom_call.1} parent=1 // pred_fallthru
      _
    // Predicated region
    $region10: #{tpu_custom_call.1} parent=1 // pred_check
      _
    $region11: #{tpu_custom_call.1} parent=1 // pred_check_branch
      %43 = sbr.rel (0) target = $region13
    $region12: #{tpu_custom_call.1} parent=1 // pred_region
      %44 = dma.done [#allocation3], 256
    $region13: #{tpu_custom_call.1} parent=1 // pred_fallthru
      _
    // Predicated region
    $region14: #{tpu_custom_call.1} parent=1 // pred_check
      _
    $region15: #{tpu_custom_call.1} parent=1 // pred_check_branch
      %46 = sbr.rel (0) target = $region17
    $region16: #{tpu_custom_call.1} parent=1 // pred_region
      %47 = dma.done [#allocation6], 256
    $region17: #{tpu_custom_call.1} parent=1 // pred_fallthru
      _
    %s48 = sadd.s32 0, 0
    %s49 = smul.u32 2, %s48
    %s50 = sadd.s32 0, 0
    %s51 = smul.u32 2, %s50
    %p52 = scmp.eq.s32.totalorder 0, 0
    // Predicated region
    $region18: #{tpu_custom_call.1} parent=1 // pred_check
      %p53 = pneg %p52
    $region19: #{tpu_custom_call.1} parent=1 // pred_check_branch
      %55 = sbr.rel (%p53) target = $region21
    $region20: #{tpu_custom_call.1} parent=1 // pred_region
      %56 = vst [vmem:[#allocation7] sm:$0xff] 0.0
    $region21: #{tpu_custom_call.1} parent=1 // pred_fallthru
      _
    %v57 = vld [vmem:[#allocation2] sm:$0xff]
    %v58 = vld [vmem:[#allocation2 + $0x8] sm:$0xff]
    %v59 = vld [vmem:[#allocation5] sm:$0xff]
    %v60 = vld [vmem:[#allocation5 + $0x8] sm:$0xff]
    %v61 = vmax.f32 %v57, 0.0
    %v62 = vmax.f32 %v58, 0.0
    %v63 = vand.u32 2147483647, %v57
    %v64 = vand.u32 2147483647, %v58
    %v65 = vsub.f32 0.0, %v63
    %v66 = vsub.f32 0.0, %v64
    %v67 = vmul.f32 %v65, 1.442695
    %v68 = vpow.pop %v67
    %v69 = vmul.f32 %v66, 1.442695
    %v70 = vpow.pop %v69
    %v71 = vadd.f32 %v68, 1.0
    %v72 = vlog2.pop %v71
    %v73 = vmul.f32 %v72, 0.6931472
    %v74 = vmul.f32 -0.5, %v68
    %v75 = vadd.f32 %v74, 1.0
    %v76 = vmul.f32 %v75, %v68
    %v77 = vand.u32 2147483647, %v68
    %vm78 = vcmp.lt.f32.partialorder %v77, 0.0004427343
    %v79 = vsel %vm78, %v76, %v73
    %v80 = vadd.f32 %v70, 1.0
    %v81 = vlog2.pop %v80
    %v82 = vmul.f32 %v81, 0.6931472
    %v83 = vmul.f32 -0.5, %v70
    %v84 = vadd.f32 %v83, 1.0
    %v85 = vmul.f32 %v84, %v70
    %v86 = vand.u32 2147483647, %v70
    %vm87 = vcmp.lt.f32.partialorder %v86, 0.0004427343
    %v88 = vsel %vm87, %v85, %v82
    %v89 = vadd.f32 %v61, %v79
    %v90 = vadd.f32 %v62, %v88
    %v91 = vmul.f32 %v59, %v57
    %v92 = vmul.f32 %v60, %v58
    %v93 = vsub.f32 %v89, %v91
    %v94 = vsub.f32 %v90, %v92
    %v95 = vsub.f32 0.0, %v93
    %v96 = vsub.f32 0.0, %v94
    %v97 = vmul.f32 %v95, 1.442695
    %v98 = vpow.pop %v97
    %v99 = vmul.f32 %v96, 1.442695
    %v100 = vpow.pop %v99
    %v101 = vsub.f32 1.0, %v98
    %v102 = vsub.f32 1.0, %v100
    %v103 = vmul.f32 %v101, %v101
    %v104 = vmul.f32 %v102, %v102
    %v105 = vmul.f32 %v103, %v93
    %v106 = vmul.f32 %v104, %v94
    %s107 = sadd.s32 0, 0
    %p108 = scmp.lt.s32.totalorder %s107, 0
    // Predicated region
    $region22: #{tpu_custom_call.1} parent=1 // pred_check
      %p109 = pneg %p108
    $region23: #{tpu_custom_call.1} parent=1 // pred_check_branch
      %111 = sbr.rel (%p109) target = $region25
    $region24: #{tpu_custom_call.1} parent=1 // pred_region
      %v112 = vld [vmem:[#allocation7] sm:$0xff]
      %v113 = vadd.f32 %v105, %v106
      %v114 = vadd.f32 %v112, %v113
      %115 = vst [vmem:[#allocation7] sm:$0xff] %v114
    $region25: #{tpu_custom_call.1} parent=1 // pred_fallthru
      _
    %p116 = scmp.ge.s32.totalorder %s107, 0
    // Predicated region
    $region26: #{tpu_custom_call.1} parent=1 // pred_check
      %p117 = pneg %p116
    $region27: #{tpu_custom_call.1} parent=1 // pred_check_branch
      %119 = sbr.rel (%p117) target = $region29
    $region28: #{tpu_custom_call.1} parent=1 // pred_region
      %s120 = smul.u32 %s107, 2048
      %v121 = vlaneseq
      %v122 = vshrl.u32 %v121, 7
      %v123 = vadd.s32 %v122, 8
      %v124 = vlaneseq
      %v125 = vand.u32 %v124, 127
      %v126 = vmul.u32 %v122, 128
      %v127 = vmul.u32 %v123, 128
      %v128 = vstv %s120
      %v129 = vadd.s32 %v128, %v126
      %v130 = vadd.s32 %v128, %v127
      %v131 = vadd.s32 %v129, %v125
      %v132 = vadd.s32 %v130, %v125
      %vm133 = vcmp.lt.s32.totalorder %v131, 2048
      %vm134 = vcmp.lt.s32.totalorder %v132, 2048
      %v135 = vld [vmem:[#allocation7] sm:$0xff]
      %v136 = vsel %vm133, %v105, 0.0
      %v137 = vsel %vm134, %v106, 0.0
      %v138 = vadd.f32 %v136, %v137
      %v139 = vadd.f32 %v135, %v138
      %140 = vst [vmem:[#allocation7] sm:$0xff] %v139
    $region29: #{tpu_custom_call.1} parent=1 // pred_fallthru
      _
    // Predicated region
    $region30: #{tpu_custom_call.1} parent=1 // pred_check
      _
    $region31: #{tpu_custom_call.1} parent=1 // pred_check_branch
      %142 = sbr.rel (0) target = $region33
    $region32: #{tpu_custom_call.1} parent=1 // pred_region
      %s144 = ssub.s32 128, 128
      %145 = vsyncadd [#allocation4], %s144
      %s147 = sshll.u32 [#allocation7], 4
      %s148 = int_to_ptr.vmem [resolvable:$true] %s147
      %150 = dma.vmem_to_hbm [thread:$0]  %s148, 128, %s2, [#allocation4]
    $region33: #{tpu_custom_call.1} parent=1 // pred_fallthru
      _
    // Predicated region
    $region34: #{tpu_custom_call.1} parent=1 // pred_check
      _
    $region35: #{tpu_custom_call.1} parent=1 // pred_check_branch
      %152 = sbr.rel (0) target = $region37
    $region36: #{tpu_custom_call.1} parent=1 // pred_region
      %153 = dma.done [#allocation4], 128
    $region37: #{tpu_custom_call.1} parent=1 // pred_fallthru
      _
    %154 = vsyncpa [#allocation3], 1
    %155 = vsyncpa [#allocation6], 1
    %156 = vsyncpa [#allocation4], 1

</llo_original>
